<compile_context>
chip_gen: v7x
topology: tpu7x:2x2x1
jax: 0.10.0
libtpu: 0.0.40
codegen_flags: <defaults>
</compile_context>

<pallas_src>
import functools

import jax
import jax.numpy as jnp
from jax.experimental import pallas as pl
from jax.experimental.pallas import tpu as pltpu

EPS = 1e-5
_LANE = 128
_MAX_TILE = 2048
_VMEM_LIMIT = 16 * 1024 * 1024  # real per-call footprint at _MAX_TILE is < 5 MiB


# ---------------------------------------------------------------------------
# Small helpers
# ---------------------------------------------------------------------------
def _round_up(x, m):
    return (x + m - 1) // m * m


def _choose_tile(m_flat, max_tile=_MAX_TILE):
    """Largest multiple-of-128 divisor of m_flat that is <= max_tile and, whenever m_flat >= 256,
    leaves at least 2 grid steps (keeps both v7x TensorCores busy)."""
    cap = min(max_tile, m_flat if m_flat < 2 * _LANE else m_flat // 2)
    t = (cap // _LANE) * _LANE
    while t > _LANE and m_flat % t != 0:
        t -= _LANE
    return max(t, _LANE)


def _patch_spec(k, tm, num_tiles):
    """BlockSpec for the streaming patch operand; deeper pipelining on long grids."""
    idx = lambda t: (0, t)
    if num_tiles > 2:
        try:
            return pl.BlockSpec((k, tm), idx, pipeline_mode=pl.Buffered(3))
        except TypeError:  # older BlockSpec without pipeline_mode
            pass
    return pl.BlockSpec((k, tm), idx)


def _im2col_flat(x, k=3, stride=2, pad=1):
    """x: [N, C, H, W] -> (patches [C*k*k, Mflat], valid_m, (OH, OW)).

    Column order: flat index = n*(OH*OW) + i*OW + j; trailing columns zero-padded so Mflat is a
    multiple of 128 (lane-dense tiles). K order is (c, kh, kw), matching weight.reshape(Cout, -1).
    """
    n, c, h, w = x.shape
    oh = (h + 2 * pad - k) // stride + 1
    ow = (w + 2 * pad - k) // stride + 1
    xp = jnp.pad(x, ((0, 0), (0, 0), (pad, pad), (pad, pad)))
    taps = []
    for di in range(k):
        for dj in range(k):
            taps.append(xp[:, :, di:di + stride * oh:stride, dj:dj + stride * ow:stride])
    p = jnp.stack(taps, axis=2)                               # [N, C, k*k, OH, OW]
    p = p.transpose(1, 2, 0, 3, 4).reshape(c * k * k, n * oh * ow)   # [K, N*M]
    valid_m = n * oh * ow
    m_flat = _round_up(valid_m, _LANE)
    if m_flat != valid_m:
        p = jnp.pad(p, ((0, 0), (0, m_flat - valid_m)))
    return p, valid_m, (oh, ow)


# ---------------------------------------------------------------------------
# Pallas kernels
# ---------------------------------------------------------------------------
def _conv_stage_kernel(p_ref, w_ref, b_ref, y_ref, stat_ref, *, tile_m, valid_m, total_m):
    """Conv-as-matmul (lane-dense) + bias + ReLU + fused per-tile BN partial stats.

    p_ref : (K, TM)      bf16   im2col patches for this flat (batch*spatial) tile
    w_ref : (32, K)      bf16   resident weights
    b_ref : (32, 1)      f32    resident bias
    y_ref : (32, TM)            pre-BN (post-ReLU) activation tile (bf16 stage-1, f32 stage-2)
    stat_ref: (1, 32, 2) f32    per-channel [sum, sum-of-squares] for this tile
    """
    y = jnp.dot(w_ref[...], p_ref[...], preferred_element_type=jnp.float32)  # MXU, f32 accumulate
    y = jnp.maximum(y + b_ref[...], 0.0)                                     # bias + ReLU
    if valid_m < total_m:
        # zero the lane-padding columns so the BN statistics stay exact
        col = pl.program_id(0) * tile_m + jax.lax.broadcasted_iota(jnp.int32, y.shape, 1)
        y = jnp.where(col < valid_m, y, 0.0)
    y_ref[...] = y.astype(y_ref.dtype)
    s = jnp.sum(y, axis=1, keepdims=True)                                    # [32, 1]
    q = jnp.sum(y * y, axis=1, keepdims=True)                                # [32, 1]
    stat_ref[...] = jnp.concatenate([s, q], axis=1)[None]                    # (1, 32, 2)


def _finalize_kernel(y_ref, scale_ref, shift_ref, o_ref):
    """BN-2 normalize (per-channel affine from global stats) + Tanh + 5-bit quantize."""
    z = y_ref[...].astype(jnp.float32) * scale_ref[...] + shift_ref[...]
    z = jnp.tanh(z)
    z = jnp.clip(z, 0.0, 1.0)
    # round-to-nearest (floor(x+0.5); differs from torch.round only at exact halves)
    z = jnp.floor(z * 31.0 + 0.5) * (1.0 / 31.0)
    o_ref[...] = z.astype(o_ref.dtype)


# ---------------------------------------------------------------------------
# pallas_call wrappers
# ---------------------------------------------------------------------------
def _conv_stage(p_flat_bf16, w_bf16, bias_f32, *, valid_m, out_dtype):
    """Tiled conv stage over the flattened (batch*spatial) axis.

    Returns (pre-BN activation [32, Mflat] out_dtype, per-tile stats [nt, 32, 2] f32).
    """
    k, m_flat = p_flat_bf16.shape
    cout = w_bf16.shape[0]
    tm = _choose_tile(m_flat)
    nt = m_flat // tm
    kern = functools.partial(_conv_stage_kernel, tile_m=tm, valid_m=valid_m, total_m=m_flat)
    return pl.pallas_call(
        kern,
        grid=(nt,),
        in_specs=[
            _patch_spec(k, tm, nt),                          # streaming patches
            pl.BlockSpec((cout, k), lambda t: (0, 0)),       # weights resident
            pl.BlockSpec((cout, 1), lambda t: (0, 0)),       # bias resident
        ],
        out_specs=[
            pl.BlockSpec((cout, tm), lambda t: (0, t)),      # lane-dense activation tile
            pl.BlockSpec((1, cout, 2), lambda t: (t, 0, 0)),  # merged [sum, sumsq] block
        ],
        out_shape=(
            jax.ShapeDtypeStruct((cout, m_flat), out_dtype),
            jax.ShapeDtypeStruct((nt, cout, 2), jnp.float32),
        ),
        compiler_params=pltpu.CompilerParams(
            dimension_semantics=("parallel",),
            vmem_limit_bytes=_VMEM_LIMIT,
        ),
    )(p_flat_bf16, w_bf16, bias_f32)


def _finalize(y_pre, scale, shift):
    cout, m_flat = y_pre.shape
    tm = _choose_tile(m_flat)
    return pl.pallas_call(
        _finalize_kernel,
        grid=(m_flat // tm,),
        in_specs=[
            pl.BlockSpec((cout, tm), lambda t: (0, t)),
            pl.BlockSpec((cout, 1), lambda t: (0, 0)),
            pl.BlockSpec((cout, 1), lambda t: (0, 0)),
        ],
        out_specs=pl.BlockSpec((cout, tm), lambda t: (0, t)),
        out_shape=jax.ShapeDtypeStruct((cout, m_flat), jnp.float32),
        compiler_params=pltpu.CompilerParams(
            dimension_semantics=("parallel",),
            vmem_limit_bytes=_VMEM_LIMIT,
        ),
    )(y_pre, scale, shift)


def _bn_scale_shift(stats, count, gamma, beta):
    """Training-mode BN (biased variance, eps=1e-5) folded into per-channel scale/shift."""
    tot = jnp.sum(stats, axis=0)                                  # [32, 2]
    mean = tot[:, 0:1] / count
    var = jnp.maximum(tot[:, 1:2] / count - mean * mean, 0.0)
    scale = gamma.reshape(-1, 1) * jax.lax.rsqrt(var + EPS)
    shift = beta.reshape(-1, 1) - mean * scale
    return scale, shift                                           # each [32, 1]


# ---------------------------------------------------------------------------
# Forward pass
# ---------------------------------------------------------------------------
def encoder_forward(x_nchw, params):
    """x_nchw: [N, 1, H, W] float32. Returns [N, 32, H//4, W//4] float32 (NCHW)."""
    n = x_nchw.shape[0]

    # ---- stage 1: Conv(1->32) + ReLU (+ BN-1 stats), bf16 activation writeback ----
    p1, valid1, (oh1, ow1) = _im2col_flat(x_nchw)                  # [9, Mflat1]
    w1 = params["w1"].reshape(32, 9).astype(jnp.bfloat16)
    y1, st1 = _conv_stage(p1.astype(jnp.bfloat16), w1, params["b1"].reshape(32, 1),
                          valid_m=valid1, out_dtype=jnp.bfloat16)
    scale1, shift1 = _bn_scale_shift(st1, valid1, params["g1"], params["be1"])

    # BN-1 affine (fused by XLA into the stage-2 patch-building producer) + spatial reshape.
    y1n = y1[:, :valid1].astype(jnp.float32) * scale1 + shift1     # [32, N*M1]
    y1n = y1n.reshape(32, n, oh1, ow1).transpose(1, 0, 2, 3)       # [N, 32, OH1, OW1]

    # ---- stage 2: Conv(32->32) + ReLU (+ BN-2 stats); f32 activation (quantization safety) ----
    # TODO(synk): eliminate this 9x-expanded im2col with an in-kernel direct conv (halo read).
    p2, valid2, (oh2, ow2) = _im2col_flat(y1n)                     # [288, Mflat2]
    w2 = params["w2"].reshape(32, 288).astype(jnp.bfloat16)
    y2, st2 = _conv_stage(p2.astype(jnp.bfloat16), w2, params["b2"].reshape(32, 1),
                          valid_m=valid2, out_dtype=jnp.float32)
    scale2, shift2 = _bn_scale_shift(st2, valid2, params["g2"], params["be2"])

    # ---- BN-2 + Tanh + quantize (lane-dense), then reshape to NCHW ----
    out = _finalize(y2, scale2, shift2)                            # [32, Mflat2]
    out = out[:, :valid2].reshape(32, n, oh2, ow2).transpose(1, 0, 2, 3)
    return out


def init_params(key):
    k1, k2, k3, k4 = jax.random.split(key, 4)
    w1 = jax.random.normal(k1, (32, 1, 3, 3), jnp.float32) * 0.3
    b1 = jax.random.normal(k2, (32,), jnp.float32) * 0.1
    w2 = jax.random.normal(k3, (32, 32, 3, 3), jnp.float32) * 0.1
    b2 = jax.random.normal(k4, (32,), jnp.float32) * 0.1
    ones = jnp.ones((32,), jnp.float32)     # BatchNorm2d default affine: weight=1, bias=0
    zeros = jnp.zeros((32,), jnp.float32)
    return {"w1": w1, "b1": b1, "g1": ones, "be1": zeros,
            "w2": w2, "b2": b2, "g2": ones, "be2": zeros}


if __name__ == "__main__":
    key = jax.random.PRNGKey(0)
    pkey, xkey = jax.random.split(key)
    params = init_params(pkey)
    x = jax.random.normal(xkey, (2, 1, 16, 16), jnp.float32)       # NCHW, Cin=1 per the module

    out = jax.jit(lambda xx: encoder_forward(xx, params))(x)
    out = jax.block_until_ready(out)
    assert out.shape == (2, 32, 4, 4), out.shape
    assert bool(jnp.all(jnp.isfinite(out)))
    print("KERNEL_OK")
</pallas_src>

<mosaic_0001>
module attributes {stable_mosaic.version = 11 : i64} {
  func.func @_conv_stage_kernel(%arg0: i32, %arg1: memref<9x128xbf16, #tpu.memory_space<vmem>>, %arg2: memref<32x9xbf16, #tpu.memory_space<vmem>>, %arg3: memref<32x1xf32, #tpu.memory_space<vmem>>, %arg4: memref<32x128xbf16, #tpu.memory_space<vmem>>, %arg5: memref<1x32x2xf32, #tpu.memory_space<vmem>>) attributes {dimension_semantics = [#tpu.dimension_semantics<parallel>], iteration_bounds = array<i64: 1>, scalar_prefetch = 0 : i64, scratch_operands = 0 : i64, tpu.core_type = #tpu.core_type<tc>, window_params = [{transform_indices = @transform_0, window_bounds = array<i64: 9, 128>}, {pipeline_mode = #tpu.pipeline_mode<synchronous>, transform_indices = @transform_1, window_bounds = array<i64: 32, 9>}, {pipeline_mode = #tpu.pipeline_mode<synchronous>, transform_indices = @transform_2, window_bounds = array<i64: 32, 1>}, {transform_indices = @transform_3, window_bounds = array<i64: 32, 128>}, {transform_indices = @transform_4, window_bounds = array<i64: 1, 32, 2>}]} {
    %c0 = arith.constant 0 : index
    %c0_0 = arith.constant 0 : index
    %0 = vector.load %arg2[%c0, %c0_0] : memref<32x9xbf16, #tpu.memory_space<vmem>>, vector<32x9xbf16>
    %c0_1 = arith.constant 0 : index
    %c0_2 = arith.constant 0 : index
    %1 = vector.load %arg1[%c0_1, %c0_2] : memref<9x128xbf16, #tpu.memory_space<vmem>>, vector<9x128xbf16>
    %cst = arith.constant dense<0.000000e+00> : vector<32x128xf32>
    %2 = tpu.matmul %0, %1, %cst {dimension_numbers = #tpu.dot_dimension_numbers<[1], [0], [0], [1], [0, 0, 1, 1], [], []>} : vector<32x9xbf16>, vector<9x128xbf16>, vector<32x128xf32> -> vector<32x128xf32>
    %c0_3 = arith.constant 0 : index
    %c0_4 = arith.constant 0 : index
    %3 = vector.load %arg3[%c0_3, %c0_4] : memref<32x1xf32, #tpu.memory_space<vmem>>, vector<32x1xf32>
    %4 = vector.broadcast %3 : vector<32x1xf32> to vector<32x128xf32>
    %5 = arith.addf %2, %4 : vector<32x128xf32>
    %cst_5 = arith.constant 0.000000e+00 : f32
    %6 = vector.broadcast %cst_5 : f32 to vector<32x128xf32>
    %7 = arith.maximumf %5, %6 : vector<32x128xf32>
    %8 = arith.truncf %7 : vector<32x128xf32> to vector<32x128xbf16>
    %c0_6 = arith.constant 0 : index
    %c0_7 = arith.constant 0 : index
    %9 = vector.load %arg4[%c0_6, %c0_7] : memref<32x128xbf16, #tpu.memory_space<vmem>>, vector<32x128xbf16>
    tpu.vector_store %arg4[%c0_6, %c0_7], %8 {strides = array<i32>} : memref<32x128xbf16, #tpu.memory_space<vmem>>, vector<32x128xbf16>,
    %cst_8 = arith.constant dense<0.000000e+00> : vector<32xf32>
    %10 = vector.multi_reduction <add>, %7, %cst_8 [1] : vector<32x128xf32> to vector<32xf32>
    %11 = vector.shape_cast %10 : vector<32xf32> to vector<32x1xf32>
    %12 = arith.mulf %7, %7 : vector<32x128xf32>
    %cst_9 = arith.constant dense<0.000000e+00> : vector<32xf32>
    %13 = vector.multi_reduction <add>, %12, %cst_9 [1] : vector<32x128xf32> to vector<32xf32>
    %14 = vector.shape_cast %13 : vector<32xf32> to vector<32x1xf32>
    %15 = tpu.concatenate %11, %14 in 1 : vector<32x1xf32>, vector<32x1xf32> -> vector<32x2xf32>
    %16 = vector.shape_cast %15 : vector<32x2xf32> to vector<1x32x2xf32>
    %c0_10 = arith.constant 0 : index
    %c0_11 = arith.constant 0 : index
    %c0_12 = arith.constant 0 : index
    %17 = vector.load %arg5[%c0_10, %c0_11, %c0_12] : memref<1x32x2xf32, #tpu.memory_space<vmem>>, vector<1x32x2xf32>
    tpu.vector_store %arg5[%c0_10, %c0_11, %c0_12], %16 {strides = array<i32>} : memref<1x32x2xf32, #tpu.memory_space<vmem>>, vector<1x32x2xf32>,
    return
  }
  func.func @transform_0(%arg0: i32) -> (i32, i32) {
    %c0_i32 = arith.constant 0 : i32
    %c0_i32_0 = arith.constant 0 : i32
    return %c0_i32, %arg0 : i32, i32
  }
  func.func @transform_1(%arg0: i32) -> (i32, i32) {
    %c0_i32 = arith.constant 0 : i32
    %c0_i32_0 = arith.constant 0 : i32
    %c0_i32_1 = arith.constant 0 : i32
    return %c0_i32, %c0_i32_0 : i32, i32
  }
  func.func @transform_2(%arg0: i32) -> (i32, i32) {
    %c0_i32 = arith.constant 0 : i32
    %c0_i32_0 = arith.constant 0 : i32
    %c0_i32_1 = arith.constant 0 : i32
    return %c0_i32, %c0_i32_0 : i32, i32
  }
  func.func @transform_3(%arg0: i32) -> (i32, i32) {
    %c0_i32 = arith.constant 0 : i32
    %c0_i32_0 = arith.constant 0 : i32
    return %c0_i32, %arg0 : i32, i32
  }
  func.func @transform_4(%arg0: i32) -> (i32, i32, i32) {
    %c0_i32 = arith.constant 0 : i32
    %c0_i32_0 = arith.constant 0 : i32
    %c0_i32_1 = arith.constant 0 : i32
    return %arg0, %c0_i32, %c0_i32_0 : i32, i32, i32
  }
}

module attributes {stable_mosaic.version = 11 : i64} {
  func.func @_conv_stage_kernel(%arg0: i32, %arg1: memref<288x128xbf16, #tpu.memory_space<vmem>>, %arg2: memref<32x288xbf16, #tpu.memory_space<vmem>>, %arg3: memref<32x1xf32, #tpu.memory_space<vmem>>, %arg4: memref<32x128xf32, #tpu.memory_space<vmem>>, %arg5: memref<1x32x2xf32, #tpu.memory_space<vmem>>) attributes {dimension_semantics = [#tpu.dimension_semantics<parallel>], iteration_bounds = array<i64: 1>, scalar_prefetch = 0 : i64, scratch_operands = 0 : i64, tpu.core_type = #tpu.core_type<tc>, window_params = [{transform_indices = @transform_0, window_bounds = array<i64: 288, 128>}, {pipeline_mode = #tpu.pipeline_mode<synchronous>, transform_indices = @transform_1, window_bounds = array<i64: 32, 288>}, {pipeline_mode = #tpu.pipeline_mode<synchronous>, transform_indices = @transform_2, window_bounds = array<i64: 32, 1>}, {transform_indices = @transform_3, window_bounds = array<i64: 32, 128>}, {transform_indices = @transform_4, window_bounds = array<i64: 1, 32, 2>}]} {
    %c0 = arith.constant 0 : index
    %c0_0 = arith.constant 0 : index
    %0 = vector.load %arg2[%c0, %c0_0] : memref<32x288xbf16, #tpu.memory_space<vmem>>, vector<32x288xbf16>
    %c0_1 = arith.constant 0 : index
    %c0_2 = arith.constant 0 : index
    %1 = vector.load %arg1[%c0_1, %c0_2] : memref<288x128xbf16, #tpu.memory_space<vmem>>, vector<288x128xbf16>
    %cst = arith.constant dense<0.000000e+00> : vector<32x128xf32>
    %2 = tpu.matmul %0, %1, %cst {dimension_numbers = #tpu.dot_dimension_numbers<[1], [0], [0], [1], [0, 0, 1, 1], [], []>} : vector<32x288xbf16>, vector<288x128xbf16>, vector<32x128xf32> -> vector<32x128xf32>
    %c0_3 = arith.constant 0 : index
    %c0_4 = arith.constant 0 : index
    %3 = vector.load %arg3[%c0_3, %c0_4] : memref<32x1xf32, #tpu.memory_space<vmem>>, vector<32x1xf32>
    %4 = vector.broadcast %3 : vector<32x1xf32> to vector<32x128xf32>
    %5 = arith.addf %2, %4 : vector<32x128xf32>
    %cst_5 = arith.constant 0.000000e+00 : f32
    %6 = vector.broadcast %cst_5 : f32 to vector<32x128xf32>
    %7 = arith.maximumf %5, %6 : vector<32x128xf32>
    %c128_i32 = arith.constant 128 : i32
    %8 = arith.muli %arg0, %c128_i32 : i32
    %9 = tpu.iota {dimensions = array<i32: 1>} : vector<32x128xi32>
    %10 = vector.broadcast %8 : i32 to vector<32x128xi32>
    %11 = arith.addi %10, %9 : vector<32x128xi32>
    %c32_i32 = arith.constant 32 : i32
    %12 = vector.broadcast %c32_i32 : i32 to vector<32x128xi32>
    %13 = arith.cmpi slt, %11, %12 : vector<32x128xi32>
    %cst_6 = arith.constant 0.000000e+00 : f32
    %14 = vector.broadcast %cst_6 : f32 to vector<32x128xf32>
    %15 = arith.select %13, %7, %14 : vector<32x128xi1>, vector<32x128xf32>
    %c0_7 = arith.constant 0 : index
    %c0_8 = arith.constant 0 : index
    %16 = vector.load %arg4[%c0_7, %c0_8] : memref<32x128xf32, #tpu.memory_space<vmem>>, vector<32x128xf32>
    tpu.vector_store %arg4[%c0_7, %c0_8], %15 {strides = array<i32>} : memref<32x128xf32, #tpu.memory_space<vmem>>, vector<32x128xf32>,
    %cst_9 = arith.constant dense<0.000000e+00> : vector<32xf32>
    %17 = vector.multi_reduction <add>, %15, %cst_9 [1] : vector<32x128xf32> to vector<32xf32>
    %18 = vector.shape_cast %17 : vector<32xf32> to vector<32x1xf32>
    %19 = arith.mulf %15, %15 : vector<32x128xf32>
    %cst_10 = arith.constant dense<0.000000e+00> : vector<32xf32>
    %20 = vector.multi_reduction <add>, %19, %cst_10 [1] : vector<32x128xf32> to vector<32xf32>
    %21 = vector.shape_cast %20 : vector<32xf32> to vector<32x1xf32>
    %22 = tpu.concatenate %18, %21 in 1 : vector<32x1xf32>, vector<32x1xf32> -> vector<32x2xf32>
    %23 = vector.shape_cast %22 : vector<32x2xf32> to vector<1x32x2xf32>
    %c0_11 = arith.constant 0 : index
    %c0_12 = arith.constant 0 : index
    %c0_13 = arith.constant 0 : index
    %24 = vector.load %arg5[%c0_11, %c0_12, %c0_13] : memref<1x32x2xf32, #tpu.memory_space<vmem>>, vector<1x32x2xf32>
    tpu.vector_store %arg5[%c0_11, %c0_12, %c0_13], %23 {strides = array<i32>} : memref<1x32x2xf32, #tpu.memory_space<vmem>>, vector<1x32x2xf32>,
    return
  }
  func.func @transform_0(%arg0: i32) -> (i32, i32) {
    %c0_i32 = arith.constant 0 : i32
    %c0_i32_0 = arith.constant 0 : i32
    return %c0_i32, %arg0 : i32, i32
  }
  func.func @transform_1(%arg0: i32) -> (i32, i32) {
    %c0_i32 = arith.constant 0 : i32
    %c0_i32_0 = arith.constant 0 : i32
    %c0_i32_1 = arith.constant 0 : i32
    return %c0_i32, %c0_i32_0 : i32, i32
  }
  func.func @transform_2(%arg0: i32) -> (i32, i32) {
    %c0_i32 = arith.constant 0 : i32
    %c0_i32_0 = arith.constant 0 : i32
    %c0_i32_1 = arith.constant 0 : i32
    return %c0_i32, %c0_i32_0 : i32, i32
  }
  func.func @transform_3(%arg0: i32) -> (i32, i32) {
    %c0_i32 = arith.constant 0 : i32
    %c0_i32_0 = arith.constant 0 : i32
    return %c0_i32, %arg0 : i32, i32
  }
  func.func @transform_4(%arg0: i32) -> (i32, i32, i32) {
    %c0_i32 = arith.constant 0 : i32
    %c0_i32_0 = arith.constant 0 : i32
    %c0_i32_1 = arith.constant 0 : i32
    return %arg0, %c0_i32, %c0_i32_0 : i32, i32, i32
  }
}

module attributes {stable_mosaic.version = 11 : i64} {
  func.func @_finalize_kernel(%arg0: i32, %arg1: memref<32x128xf32, #tpu.memory_space<vmem>>, %arg2: memref<32x1xf32, #tpu.memory_space<vmem>>, %arg3: memref<32x1xf32, #tpu.memory_space<vmem>>, %arg4: memref<32x128xf32, #tpu.memory_space<vmem>>) attributes {dimension_semantics = [#tpu.dimension_semantics<parallel>], iteration_bounds = array<i64: 1>, scalar_prefetch = 0 : i64, scratch_operands = 0 : i64, tpu.core_type = #tpu.core_type<tc>, window_params = [{transform_indices = @transform_0, window_bounds = array<i64: 32, 128>}, {pipeline_mode = #tpu.pipeline_mode<synchronous>, transform_indices = @transform_1, window_bounds = array<i64: 32, 1>}, {pipeline_mode = #tpu.pipeline_mode<synchronous>, transform_indices = @transform_2, window_bounds = array<i64: 32, 1>}, {transform_indices = @transform_3, window_bounds = array<i64: 32, 128>}]} {
    %c0 = arith.constant 0 : index
    %c0_0 = arith.constant 0 : index
    %0 = vector.load %arg1[%c0, %c0_0] : memref<32x128xf32, #tpu.memory_space<vmem>>, vector<32x128xf32>
    %c0_1 = arith.constant 0 : index
    %c0_2 = arith.constant 0 : index
    %1 = vector.load %arg2[%c0_1, %c0_2] : memref<32x1xf32, #tpu.memory_space<vmem>>, vector<32x1xf32>
    %2 = vector.broadcast %1 : vector<32x1xf32> to vector<32x128xf32>
    %3 = arith.mulf %0, %2 : vector<32x128xf32>
    %c0_3 = arith.constant 0 : index
    %c0_4 = arith.constant 0 : index
    %4 = vector.load %arg3[%c0_3, %c0_4] : memref<32x1xf32, #tpu.memory_space<vmem>>, vector<32x1xf32>
    %5 = vector.broadcast %4 : vector<32x1xf32> to vector<32x128xf32>
    %6 = arith.addf %3, %5 : vector<32x128xf32>
    %7 = math.tanh %6 : vector<32x128xf32>
    %cst = arith.constant 0.000000e+00 : f32
    %cst_5 = arith.constant 1.000000e+00 : f32
    %8 = vector.broadcast %cst : f32 to vector<32x128xf32>
    %9 = arith.maximumf %8, %7 : vector<32x128xf32>
    %10 = vector.broadcast %cst_5 : f32 to vector<32x128xf32>
    %11 = arith.minimumf %10, %9 : vector<32x128xf32>
    %cst_6 = arith.constant 3.100000e+01 : f32
    %12 = vector.broadcast %cst_6 : f32 to vector<32x128xf32>
    %13 = arith.mulf %11, %12 : vector<32x128xf32>
    %cst_7 = arith.constant 5.000000e-01 : f32
    %14 = vector.broadcast %cst_7 : f32 to vector<32x128xf32>
    %15 = arith.addf %13, %14 : vector<32x128xf32>
    %16 = math.floor %15 : vector<32x128xf32>
    %cst_8 = arith.constant 0.0322580636 : f32
    %17 = vector.broadcast %cst_8 : f32 to vector<32x128xf32>
    %18 = arith.mulf %16, %17 : vector<32x128xf32>
    %c0_9 = arith.constant 0 : index
    %c0_10 = arith.constant 0 : index
    %19 = vector.load %arg4[%c0_9, %c0_10] : memref<32x128xf32, #tpu.memory_space<vmem>>, vector<32x128xf32>
    tpu.vector_store %arg4[%c0_9, %c0_10], %18 {strides = array<i32>} : memref<32x128xf32, #tpu.memory_space<vmem>>, vector<32x128xf32>,
    return
  }
  func.func @transform_0(%arg0: i32) -> (i32, i32) {
    %c0_i32 = arith.constant 0 : i32
    %c0_i32_0 = arith.constant 0 : i32
    return %c0_i32, %arg0 : i32, i32
  }
  func.func @transform_1(%arg0: i32) -> (i32, i32) {
    %c0_i32 = arith.constant 0 : i32
    %c0_i32_0 = arith.constant 0 : i32
    %c0_i32_1 = arith.constant 0 : i32
    return %c0_i32, %c0_i32_0 : i32, i32
  }
  func.func @transform_2(%arg0: i32) -> (i32, i32) {
    %c0_i32 = arith.constant 0 : i32
    %c0_i32_0 = arith.constant 0 : i32
    %c0_i32_1 = arith.constant 0 : i32
    return %c0_i32, %c0_i32_0 : i32, i32
  }
  func.func @transform_3(%arg0: i32) -> (i32, i32) {
    %c0_i32 = arith.constant 0 : i32
    %c0_i32_0 = arith.constant 0 : i32
    return %c0_i32, %arg0 : i32, i32
  }
}

</mosaic_0001>

<llo_original>
// kernel: _lambda_.3
$region0: #{_lambda_.3}
  #allocation0 [shape = 'u32[]', space=smem, size = 0x4, offset = 0x4, fixed_abs, tag = 'smem constant byte address 0x4 - core index']
  #allocation1 [shape = 'u32[144,128]{1,0:T(1,128)}', space=vmem, size = 0x12000, scoped, tag = 'internal scratch']
  %s0 = inlined_call_operand.vmem [shape: bf16[9,128], index: 0, kind: input, shape index: {}]
  %s1 = inlined_call_operand.vmem [shape: bf16[32,9], index: 1, kind: input, shape index: {}]
  %s2 = inlined_call_operand.vmem [shape: f32[32,1], index: 2, kind: input, shape index: {}]
  %s3 = inlined_call_operand.vmem [shape: bf16[32,128], index: 3, kind: output, shape index: {0}]
  %s4 = inlined_call_operand.vmem [shape: f32[1,32,2], index: 4, kind: output, shape index: {1}]
  %5 = xla_tuple %s3, %s4
  %s6 = sld [smem:[#allocation0]]
  $region30: #{_lambda_.3} parent=0
    _
  %s8 = ssub.s32 1, %s6
  %s9 = scalar_select 0, %s8, %s6
  // Predicated region
  $region2: #{_lambda_.3} parent=0 // pred_check
    _
  $region3: #{_lambda_.3} parent=0 // pred_check_branch
    %11 = sbr.rel (0) target = $region5
  $region4: #{_lambda_.3} parent=0 // pred_region
    _
  $region5: #{_lambda_.3} parent=0 // pred_fallthru
    _
  // Predicated region
  $region6: #{_lambda_.3} parent=0 // pred_check
    _
  $region7: #{_lambda_.3} parent=0 // pred_check_branch
    %13 = sbr.rel (0) target = $region9
  $region8: #{_lambda_.3} parent=0 // pred_region
    _
  $region9: #{_lambda_.3} parent=0 // pred_fallthru
    _
  // Predicated region
  $region10: #{_lambda_.3} parent=0 // pred_check
    _
  $region11: #{_lambda_.3} parent=0 // pred_check_branch
    %15 = sbr.rel (0) target = $region13
  $region12: #{_lambda_.3} parent=0 // pred_region
    _
  $region13: #{_lambda_.3} parent=0 // pred_fallthru
    _
  %v17 = vld [vmem:[%s1] sm:$0xf]
  %v18 = vld [vmem:[%s1 + $0x4] sm:$0xf]
  %v19 = vld [vmem:[%s1 + $0x8] sm:$0xf]
  %v20 = vld [vmem:[%s1 + $0xc] sm:$0xf]
  %v21 = vld [vmem:[%s0] sm:$0xf]
  %v22 = vld [vmem:[%s0 + $0x4] sm:$0x1]
  %v23 = vld [vmem:[%s2] sm:$0xff]
  %v24 = vld [vmem:[%s2 + $0x8] sm:$0xff]
  %v25 = vld [vmem:[%s2 + $0x10] sm:$0xff]
  %v26 = vld [vmem:[%s2 + $0x18] sm:$0xff]
  %28 = vset.pattern.permute.xlu0 0
  %29 = vperm.xlu0 %28, %v23
  %v30 = vpop.permute.xlu0 %29
  %33 = vset.pattern.permute.xlu0 0
  %34 = vperm.xlu0 %33, %v24
  %v35 = vpop.permute.xlu0 %34
  %38 = vset.pattern.permute.xlu0 0
  %39 = vperm.xlu0 %38, %v25
  %v40 = vpop.permute.xlu0 %39
  %43 = vset.pattern.permute.xlu0 0
  %44 = vperm.xlu0 %43, %v26
  %v45 = vpop.permute.xlu0 %44
  %v51 = vunpack.c.l.b16 %v17
  %v52 = vunpack.c.l.b16 %v18
  %v53 = vunpack.c.l.b16 %v19
  %v54 = vunpack.c.l.b16 %v20
  %v55 = vpack.c.b16 %v52, %v51
  %v56 = vpack.c.b16 %v54, %v53
  %v59 = vunpack.c.l.b16 %v21
  %v60 = vunpack.c.l.b16 %v22
  %v61 = vpack.c.b16 %v60, %v59
  %vm62 = vcmask 72704
  %v64 = vsel %vm62, %v55, 0
  %v67 = vsel %vm62, %v56, 0
  %vm69 = vcmask 1043456
  %vm70 = vcmask 1044480
  %v71 = vsel %vm69, 4294967295, 65535
  %v72 = vsel %vm70, %v71, 0
  %v74 = vand.u32 %v61, %v72
  %76 = vmatprep.subr.bf16.mxu0 0
  %77 = vmatpush1.bf16.msra.mxu0 %v74
  %78 = vmatprep.subr.bf16.mxu0 0
  %79 = vmatpush1.bf16.msra.mxu0 0
  %80 = vmatprep.subr.bf16.mxu0 0
  %81 = vmatpush1.bf16.msra.mxu0 0
  %82 = vmatprep.subr.bf16.mxu0 0
  %83 = vmatpush1.bf16.msra.mxu0 0
  %84 = vmatprep.subr.bf16.mxu0 0
  %85 = vmatpush1.bf16.msra.mxu0 0
  %86 = vmatprep.subr.bf16.mxu0 0
  %87 = vmatpush1.bf16.msra.mxu0 0
  %88 = vmatprep.subr.bf16.mxu0 0
  %89 = vmatpush1.bf16.msra.mxu0 0
  %90 = vmatprep.subr.bf16.mxu0 0
  %91 = vmatpush1.bf16.msra.mxu0 0
  %92 = vmatprep.subr.bf16.mxu0 0
  %93 = vmatpush1.bf16.msra.mxu0 0
  %94 = vmatprep.subr.bf16.mxu0 0
  %95 = vmatpush1.bf16.msra.mxu0 0
  %96 = vmatprep.subr.bf16.mxu0 0
  %97 = vmatpush1.bf16.msra.mxu0 0
  %98 = vmatprep.subr.bf16.mxu0 0
  %99 = vmatpush1.bf16.msra.mxu0 0
  %100 = vmatprep.subr.bf16.mxu0 0
  %101 = vmatpush1.bf16.msra.mxu0 0
  %102 = vmatprep.subr.bf16.mxu0 0
  %103 = vmatpush1.bf16.msra.mxu0 0
  %104 = vmatprep.subr.bf16.mxu0 0
  %105 = vmatpush1.bf16.msra.mxu0 0
  %106 = vmatprep.subr.bf16.mxu0 0
  %107 = vmatpush1.bf16.msra.mxu0 0
  %108 = vmatprep.mubr.bf16.mxu0 0
  %109 = vmatmul.mubr.bf16.gmra.mrb[0].mxu0 %v64
  %v110 = vpop.f32.mrb[0].mxu0
  %v111 = vadd.f32 %v30, %v110
  %v112 = vpop.f32.mrb[0].mxu0
  %v113 = vpop.f32.mrb[0].mxu0
  %v114 = vadd.f32 %v35, %v113
  %v115 = vpop.f32.mrb[0].mxu0
  %116 = vmatprep.mubr.bf16.mxu0 0
  %117 = vmatmul.mubr.bf16.gmra.mrb[0].mxu0 %v67
  %v118 = vpop.f32.mrb[0].mxu0
  %v119 = vadd.f32 %v40, %v118
  %v120 = vpop.f32.mrb[0].mxu0
  %v121 = vpop.f32.mrb[0].mxu0
  %v122 = vadd.f32 %v45, %v121
  %v123 = vpop.f32.mrb[0].mxu0
  %124 = vdwg.mxu0
  %v125 = vmax.f32 %v111, 0.0
  %v126 = vmax.f32 %v114, 0.0
  %v127 = vmax.f32 %v119, 0.0
  %v128 = vmax.f32 %v122, 0.0
  %v129 = vpack.c.bf16 %v126, %v125
  %v130 = vpack.c.bf16 %v128, %v127
  %v133 = vunpack.c.l.b16 %v129
  %v134 = vunpack.c.h.b16 %v129
  %v135 = vunpack.c.l.b16 %v130
  %v136 = vunpack.c.h.b16 %v130
  %v137 = vpack.c.b16 %v133, %v133
  %v138 = vpack.c.b16 %v134, %v134
  %v139 = vpack.c.b16 %v135, %v135
  %v140 = vpack.c.b16 %v136, %v136
  %145 = vst [vmem:[%s3] sm:$0xf] %v137
  %146 = vst [vmem:[%s3 + $0x4] sm:$0xf] %v138
  %147 = vst [vmem:[%s3 + $0x8] sm:$0xf] %v139
  %148 = vst [vmem:[%s3 + $0xc] sm:$0xf] %v140
  %149 = vadd.xlane.f32.xlu0 %v125
  %v150 = vpop.xlane.xlu0 %149
  %151 = vadd.xlane.f32.xlu0 %v126
  %v152 = vpop.xlane.xlu0 %151
  %153 = vadd.xlane.f32.xlu0 %v127
  %v154 = vpop.xlane.xlu0 %153
  %155 = vadd.xlane.f32.xlu0 %v128
  %v156 = vpop.xlane.xlu0 %155
  %v157 = vmul.f32 %v125, %v125
  %v158 = vmul.f32 %v126, %v126
  %v159 = vmul.f32 %v127, %v127
  %v160 = vmul.f32 %v128, %v128
  %161 = vadd.xlane.f32.xlu0 %v157
  %v162 = vpop.xlane.xlu0 %161
  %163 = vadd.xlane.f32.xlu0 %v158
  %v164 = vpop.xlane.xlu0 %163
  %165 = vadd.xlane.f32.xlu0 %v159
  %v166 = vpop.xlane.xlu0 %165
  %167 = vadd.xlane.f32.xlu0 %v160
  %v168 = vpop.xlane.xlu0 %167
  %vm169 = vcmask 7168
  %v170 = vsel %vm169, %v150, %v162
  %v171 = vsel %vm169, %v152, %v164
  %v172 = vsel %vm169, %v154, %v166
  %v173 = vsel %vm169, %v156, %v168
  %vm174 = vcmask 15360
  %175 = vst.msk [vmem:[%s4] sm:$0xff] %vm174, %v170
  %176 = vst.msk [vmem:[%s4 + $0x8] sm:$0xff] %vm174, %v171
  %177 = vst.msk [vmem:[%s4 + $0x10] sm:$0xff] %vm174, %v172
  %178 = vst.msk [vmem:[%s4 + $0x18] sm:$0xff] %vm174, %v173
  // Predicated region
  $region14: #{_lambda_.3} parent=0 // pred_check
    _
  $region15: #{_lambda_.3} parent=0 // pred_check_branch
    %180 = sbr.rel (0) target = $region17
  $region16: #{_lambda_.3} parent=0 // pred_region
    _
  $region17: #{_lambda_.3} parent=0 // pred_fallthru
    _
  // Predicated region
  $region18: #{_lambda_.3} parent=0 // pred_check
    _
  $region19: #{_lambda_.3} parent=0 // pred_check_branch
    %182 = sbr.rel (0) target = $region21
  $region20: #{_lambda_.3} parent=0 // pred_region
    _
  $region21: #{_lambda_.3} parent=0 // pred_fallthru
    _
  // Predicated region
  $region22: #{_lambda_.3} parent=0 // pred_check
    _
  $region23: #{_lambda_.3} parent=0 // pred_check_branch
    %184 = sbr.rel (0) target = $region25
  $region24: #{_lambda_.3} parent=0 // pred_region
    _
  $region25: #{_lambda_.3} parent=0 // pred_fallthru
    _
  // Predicated region
  $region26: #{_lambda_.3} parent=0 // pred_check
    _
  $region27: #{_lambda_.3} parent=0 // pred_check_branch
    %186 = sbr.rel (0) target = $region29
  $region28: #{_lambda_.3} parent=0 // pred_region
    _
  $region29: #{_lambda_.3} parent=0 // pred_fallthru
    _

// kernel: _lambda_.5
$region0: #{_lambda_.5}
  #allocation0 [shape = 'u32[]', space=smem, size = 0x4, offset = 0x4, fixed_abs, tag = 'smem constant byte address 0x4 - core index']
  #allocation1 [shape = 'u32[144,128]{1,0:T(1,128)}', space=vmem, size = 0x12000, scoped, tag = 'internal scratch']
  %s0 = inlined_call_operand.vmem [shape: f32[32,128], index: 0, kind: input, shape index: {}]
  %s1 = inlined_call_operand.vmem [shape: f32[32,1], index: 1, kind: input, shape index: {}]
  %s2 = inlined_call_operand.vmem [shape: f32[32,1], index: 2, kind: input, shape index: {}]
  %s3 = inlined_call_operand.vmem [shape: f32[32,128], index: 3, kind: output, shape index: {}]
  %s4 = sld [smem:[#allocation0]]
  $region22: #{_lambda_.5} parent=0
    _
  %s6 = ssub.s32 1, %s4
  %s7 = scalar_select 0, %s6, %s4
  // Predicated region
  $region2: #{_lambda_.5} parent=0 // pred_check
    _
  $region3: #{_lambda_.5} parent=0 // pred_check_branch
    %9 = sbr.rel (0) target = $region5
  $region4: #{_lambda_.5} parent=0 // pred_region
    _
  $region5: #{_lambda_.5} parent=0 // pred_fallthru
    _
  // Predicated region
  $region6: #{_lambda_.5} parent=0 // pred_check
    _
  $region7: #{_lambda_.5} parent=0 // pred_check_branch
    %11 = sbr.rel (0) target = $region9
  $region8: #{_lambda_.5} parent=0 // pred_region
    _
  $region9: #{_lambda_.5} parent=0 // pred_fallthru
    _
  // Predicated region
  $region10: #{_lambda_.5} parent=0 // pred_check
    _
  $region11: #{_lambda_.5} parent=0 // pred_check_branch
    %13 = sbr.rel (0) target = $region13
  $region12: #{_lambda_.5} parent=0 // pred_region
    _
  $region13: #{_lambda_.5} parent=0 // pred_fallthru
    _
  %v14 = vld [vmem:[%s0] sm:$0xff]
  %v15 = vld [vmem:[%s0 + $0x8] sm:$0xff]
  %v16 = vld [vmem:[%s0 + $0x10] sm:$0xff]
  %v17 = vld [vmem:[%s0 + $0x18] sm:$0xff]
  %v18 = vld [vmem:[%s1] sm:$0xff]
  %v19 = vld [vmem:[%s1 + $0x8] sm:$0xff]
  %v20 = vld [vmem:[%s1 + $0x10] sm:$0xff]
  %v21 = vld [vmem:[%s1 + $0x18] sm:$0xff]
  %23 = vset.pattern.permute.xlu0 0
  %24 = vperm.xlu0 %23, %v18
  %v25 = vpop.permute.xlu0 %24
  %28 = vset.pattern.permute.xlu0 0
  %29 = vperm.xlu0 %28, %v19
  %v30 = vpop.permute.xlu0 %29
  %33 = vset.pattern.permute.xlu0 0
  %34 = vperm.xlu0 %33, %v20
  %v35 = vpop.permute.xlu0 %34
  %38 = vset.pattern.permute.xlu0 0
  %39 = vperm.xlu0 %38, %v21
  %v40 = vpop.permute.xlu0 %39
  %v42 = vmul.f32 %v14, %v25
  %v43 = vmul.f32 %v15, %v30
  %v44 = vmul.f32 %v16, %v35
  %v45 = vmul.f32 %v17, %v40
  %v46 = vld [vmem:[%s2] sm:$0xff]
  %v47 = vld [vmem:[%s2 + $0x8] sm:$0xff]
  %v48 = vld [vmem:[%s2 + $0x10] sm:$0xff]
  %v49 = vld [vmem:[%s2 + $0x18] sm:$0xff]
  %51 = vset.pattern.permute.xlu0 0
  %52 = vperm.xlu0 %51, %v46
  %v53 = vpop.permute.xlu0 %52
  %56 = vset.pattern.permute.xlu0 0
  %57 = vperm.xlu0 %56, %v47
  %v58 = vpop.permute.xlu0 %57
  %61 = vset.pattern.permute.xlu0 0
  %62 = vperm.xlu0 %61, %v48
  %v63 = vpop.permute.xlu0 %62
  %66 = vset.pattern.permute.xlu0 0
  %67 = vperm.xlu0 %66, %v49
  %v68 = vpop.permute.xlu0 %67
  %v70 = vadd.f32 %v42, %v53
  %v71 = vadd.f32 %v43, %v58
  %v72 = vadd.f32 %v44, %v63
  %v73 = vadd.f32 %v45, %v68
  %v74 = vtanh.pop %v70
  %v75 = vtanh.pop %v71
  %v76 = vtanh.pop %v72
  %v77 = vtanh.pop %v73
  %v78 = vmax.f32 %v74, 0.0
  %v79 = vmax.f32 %v75, 0.0
  %v80 = vmax.f32 %v76, 0.0
  %v81 = vmax.f32 %v77, 0.0
  %v82 = vmin.f32 %v78, 1.0
  %v83 = vmin.f32 %v79, 1.0
  %v84 = vmin.f32 %v80, 1.0
  %v85 = vmin.f32 %v81, 1.0
  %v86 = vmul.f32 %v82, 31.0
  %v87 = vmul.f32 %v83, 31.0
  %v88 = vmul.f32 %v84, 31.0
  %v89 = vmul.f32 %v85, 31.0
  %v90 = vadd.f32 %v86, 0.5
  %v91 = vadd.f32 %v87, 0.5
  %v92 = vadd.f32 %v88, 0.5
  %v93 = vadd.f32 %v89, 0.5
  %v94 = vfloor.f32 %v90
  %v95 = vfloor.f32 %v91
  %v96 = vfloor.f32 %v92
  %v97 = vfloor.f32 %v93
  %v98 = vmul.f32 %v94, 0.032258064
  %v99 = vmul.f32 %v95, 0.032258064
  %v100 = vmul.f32 %v96, 0.032258064
  %v101 = vmul.f32 %v97, 0.032258064
  %102 = vst [vmem:[%s3] sm:$0xff] %v98
  %103 = vst [vmem:[%s3 + $0x8] sm:$0xff] %v99
  %104 = vst [vmem:[%s3 + $0x10] sm:$0xff] %v100
  %105 = vst [vmem:[%s3 + $0x18] sm:$0xff] %v101
  // Predicated region
  $region14: #{_lambda_.5} parent=0 // pred_check
    _
  $region15: #{_lambda_.5} parent=0 // pred_check_branch
    %107 = sbr.rel (0) target = $region17
  $region16: #{_lambda_.5} parent=0 // pred_region
    _
  $region17: #{_lambda_.5} parent=0 // pred_fallthru
    _
  // Predicated region
  $region18: #{_lambda_.5} parent=0 // pred_check
    _
  $region19: #{_lambda_.5} parent=0 // pred_check_branch
    %109 = sbr.rel (0) target = $region21
  $region20: #{_lambda_.5} parent=0 // pred_region
    _
  $region21: #{_lambda_.5} parent=0 // pred_fallthru
    _

// kernel: _lambda_.4
$region0: #{_lambda_.4}
  #allocation0 [shape = 'u32[]', space=smem, size = 0x4, offset = 0x4, fixed_abs, tag = 'smem constant byte address 0x4 - core index']
  #allocation1 [shape = 'u32[144,128]{1,0:T(1,128)}', space=vmem, size = 0x12000, scoped, tag = 'internal scratch']
  %s0 = inlined_call_operand.vmem [shape: bf16[288,128], index: 0, kind: input, shape index: {}]
  %s1 = inlined_call_operand.vmem [shape: bf16[32,288], index: 1, kind: input, shape index: {}]
  %s2 = inlined_call_operand.vmem [shape: f32[32,1], index: 2, kind: input, shape index: {}]
  %s3 = inlined_call_operand.vmem [shape: f32[32,128], index: 3, kind: output, shape index: {0}]
  %s4 = inlined_call_operand.vmem [shape: f32[1,32,2], index: 4, kind: output, shape index: {1}]
  %5 = xla_tuple %s3, %s4
  %s6 = sld [smem:[#allocation0]]
  $region30: #{_lambda_.4} parent=0
    _
  %s8 = ssub.s32 1, %s6
  %s9 = scalar_select 0, %s8, %s6
  // Predicated region
  $region2: #{_lambda_.4} parent=0 // pred_check
    _
  $region3: #{_lambda_.4} parent=0 // pred_check_branch
    %11 = sbr.rel (0) target = $region5
  $region4: #{_lambda_.4} parent=0 // pred_region
    _
  $region5: #{_lambda_.4} parent=0 // pred_fallthru
    _
  // Predicated region
  $region6: #{_lambda_.4} parent=0 // pred_check
    _
  $region7: #{_lambda_.4} parent=0 // pred_check_branch
    %13 = sbr.rel (0) target = $region9
  $region8: #{_lambda_.4} parent=0 // pred_region
    _
  $region9: #{_lambda_.4} parent=0 // pred_fallthru
    _
  // Predicated region
  $region10: #{_lambda_.4} parent=0 // pred_check
    _
  $region11: #{_lambda_.4} parent=0 // pred_check_branch
    %15 = sbr.rel (0) target = $region13
  $region12: #{_lambda_.4} parent=0 // pred_region
    _
  $region13: #{_lambda_.4} parent=0 // pred_fallthru
    _
  %v17 = vld [vmem:[%s1] sm:$0xff]
  %v18 = vld [vmem:[%s1 + $0x8] sm:$0xf]
  %v19 = vld [vmem:[%s1 + $0xc] sm:$0xff]
  %v20 = vld [vmem:[%s1 + $0x14] sm:$0xf]
  %v21 = vld [vmem:[%s1 + $0x18] sm:$0xff]
  %v22 = vld [vmem:[%s1 + $0x20] sm:$0xf]
  %v23 = vld [vmem:[%s1 + $0x24] sm:$0xff]
  %v24 = vld [vmem:[%s1 + $0x2c] sm:$0xf]
  %v25 = vld [vmem:[%s0] sm:$0xf]
  %v26 = vld [vmem:[%s0 + $0x4] sm:$0xf]
  %v27 = vld [vmem:[%s0 + $0x8] sm:$0xf]
  %v28 = vld [vmem:[%s0 + $0xc] sm:$0xf]
  %v29 = vld [vmem:[%s0 + $0x10] sm:$0xf]
  %v30 = vld [vmem:[%s0 + $0x14] sm:$0xf]
  %v31 = vld [vmem:[%s0 + $0x18] sm:$0xf]
  %v32 = vld [vmem:[%s0 + $0x1c] sm:$0xf]
  %v33 = vld [vmem:[%s0 + $0x20] sm:$0xf]
  %v34 = vld [vmem:[%s0 + $0x24] sm:$0xf]
  %v35 = vld [vmem:[%s0 + $0x28] sm:$0xf]
  %v36 = vld [vmem:[%s0 + $0x2c] sm:$0xf]
  %v37 = vld [vmem:[%s0 + $0x30] sm:$0xf]
  %v38 = vld [vmem:[%s0 + $0x34] sm:$0xf]
  %v39 = vld [vmem:[%s0 + $0x38] sm:$0xf]
  %v40 = vld [vmem:[%s0 + $0x3c] sm:$0xf]
  %v41 = vld [vmem:[%s0 + $0x40] sm:$0xf]
  %v42 = vld [vmem:[%s0 + $0x44] sm:$0xf]
  %v43 = vld [vmem:[%s0 + $0x48] sm:$0xf]
  %v44 = vld [vmem:[%s0 + $0x4c] sm:$0xf]
  %v45 = vld [vmem:[%s0 + $0x50] sm:$0xf]
  %v46 = vld [vmem:[%s0 + $0x54] sm:$0xf]
  %v47 = vld [vmem:[%s0 + $0x58] sm:$0xf]
  %v48 = vld [vmem:[%s0 + $0x5c] sm:$0xf]
  %v49 = vld [vmem:[%s0 + $0x60] sm:$0xf]
  %v50 = vld [vmem:[%s0 + $0x64] sm:$0xf]
  %v51 = vld [vmem:[%s0 + $0x68] sm:$0xf]
  %v52 = vld [vmem:[%s0 + $0x6c] sm:$0xf]
  %v53 = vld [vmem:[%s0 + $0x70] sm:$0xf]
  %v54 = vld [vmem:[%s0 + $0x74] sm:$0xf]
  %v55 = vld [vmem:[%s0 + $0x78] sm:$0xf]
  %v56 = vld [vmem:[%s0 + $0x7c] sm:$0xf]
  %v57 = vld [vmem:[%s0 + $0x80] sm:$0xf]
  %v58 = vld [vmem:[%s0 + $0x84] sm:$0xf]
  %v59 = vld [vmem:[%s0 + $0x88] sm:$0xf]
  %v60 = vld [vmem:[%s0 + $0x8c] sm:$0xf]
  %v61 = vld [vmem:[%s2] sm:$0xff]
  %v62 = vld [vmem:[%s2 + $0x8] sm:$0xff]
  %v63 = vld [vmem:[%s2 + $0x10] sm:$0xff]
  %v64 = vld [vmem:[%s2 + $0x18] sm:$0xff]
  %66 = vset.pattern.permute.xlu0 0
  %67 = vperm.xlu0 %66, %v61
  %v68 = vpop.permute.xlu0 %67
  %71 = vset.pattern.permute.xlu0 0
  %72 = vperm.xlu0 %71, %v62
  %v73 = vpop.permute.xlu0 %72
  %76 = vset.pattern.permute.xlu0 0
  %77 = vperm.xlu0 %76, %v63
  %v78 = vpop.permute.xlu0 %77
  %81 = vset.pattern.permute.xlu0 0
  %82 = vperm.xlu0 %81, %v64
  %v83 = vpop.permute.xlu0 %82
  %v93 = vunpack.c.l.b16 %v17
  %v94 = vunpack.c.h.b16 %v17
  %v95 = vunpack.c.l.b16 %v18
  %v96 = vunpack.c.l.b16 %v19
  %v97 = vunpack.c.h.b16 %v19
  %v98 = vunpack.c.l.b16 %v20
  %v99 = vunpack.c.l.b16 %v21
  %v100 = vunpack.c.h.b16 %v21
  %v101 = vunpack.c.l.b16 %v22
  %v102 = vunpack.c.l.b16 %v23
  %v103 = vunpack.c.h.b16 %v23
  %v104 = vunpack.c.l.b16 %v24
  %v105 = vpack.c.b16 %v96, %v93
  %v106 = vpack.c.b16 %v97, %v94
  %v107 = vpack.c.b16 %v98, %v95
  %v108 = vpack.c.b16 %v102, %v99
  %v109 = vpack.c.b16 %v103, %v100
  %v110 = vpack.c.b16 %v104, %v101
  %v151 = vunpack.c.l.b16 %v25
  %v152 = vunpack.c.l.b16 %v26
  %v153 = vunpack.c.l.b16 %v27
  %v154 = vunpack.c.l.b16 %v28
  %v155 = vunpack.c.l.b16 %v29
  %v156 = vunpack.c.l.b16 %v30
  %v157 = vunpack.c.l.b16 %v31
  %v158 = vunpack.c.l.b16 %v32
  %v159 = vunpack.c.l.b16 %v33
  %v160 = vunpack.c.l.b16 %v34
  %v161 = vunpack.c.l.b16 %v35
  %v162 = vunpack.c.l.b16 %v36
  %v163 = vunpack.c.l.b16 %v37
  %v164 = vunpack.c.l.b16 %v38
  %v165 = vunpack.c.l.b16 %v39
  %v166 = vunpack.c.l.b16 %v40
  %v167 = vunpack.c.l.b16 %v41
  %v168 = vunpack.c.l.b16 %v42
  %v169 = vunpack.c.l.b16 %v43
  %v170 = vunpack.c.l.b16 %v44
  %v171 = vunpack.c.l.b16 %v45
  %v172 = vunpack.c.l.b16 %v46
  %v173 = vunpack.c.l.b16 %v47
  %v174 = vunpack.c.l.b16 %v48
  %v175 = vunpack.c.l.b16 %v49
  %v176 = vunpack.c.l.b16 %v50
  %v177 = vunpack.c.l.b16 %v51
  %v178 = vunpack.c.l.b16 %v52
  %v179 = vunpack.c.l.b16 %v53
  %v180 = vunpack.c.l.b16 %v54
  %v181 = vunpack.c.l.b16 %v55
  %v182 = vunpack.c.l.b16 %v56
  %v183 = vunpack.c.l.b16 %v57
  %v184 = vunpack.c.l.b16 %v58
  %v185 = vunpack.c.l.b16 %v59
  %v186 = vunpack.c.l.b16 %v60
  %v187 = vpack.c.b16 %v152, %v151
  %v188 = vpack.c.b16 %v154, %v153
  %v189 = vpack.c.b16 %v156, %v155
  %v190 = vpack.c.b16 %v158, %v157
  %v191 = vpack.c.b16 %v160, %v159
  %v192 = vpack.c.b16 %v162, %v161
  %v193 = vpack.c.b16 %v164, %v163
  %v194 = vpack.c.b16 %v166, %v165
  %v195 = vpack.c.b16 %v168, %v167
  %v196 = vpack.c.b16 %v170, %v169
  %v197 = vpack.c.b16 %v172, %v171
  %v198 = vpack.c.b16 %v174, %v173
  %v199 = vpack.c.b16 %v176, %v175
  %v200 = vpack.c.b16 %v178, %v177
  %v201 = vpack.c.b16 %v180, %v179
  %v202 = vpack.c.b16 %v182, %v181
  %v203 = vpack.c.b16 %v184, %v183
  %v204 = vpack.c.b16 %v186, %v185
  %vm223 = vcmask 261120
  %v225 = vsel %vm223, %v107, 0
  %v228 = vsel %vm223, %v110, 0
  %230 = vmatprep.subr.bf16.mxu0 0
  %231 = vmatpush1.bf16.msra.mxu0 %v187
  %232 = vmatprep.subr.bf16.mxu0 0
  %233 = vmatpush1.bf16.msra.mxu0 %v188
  %234 = vmatprep.subr.bf16.mxu0 0
  %235 = vmatpush1.bf16.msra.mxu0 %v189
  %236 = vmatprep.subr.bf16.mxu0 0
  %237 = vmatpush1.bf16.msra.mxu0 %v190
  %238 = vmatprep.subr.bf16.mxu0 0
  %239 = vmatpush1.bf16.msra.mxu0 %v191
  %240 = vmatprep.subr.bf16.mxu0 0
  %241 = vmatpush1.bf16.msra.mxu0 %v192
  %242 = vmatprep.subr.bf16.mxu0 0
  %243 = vmatpush1.bf16.msra.mxu0 %v193
  %244 = vmatprep.subr.bf16.mxu0 0
  %245 = vmatpush1.bf16.msra.mxu0 %v194
  %246 = vmatprep.subr.bf16.mxu0 0
  %247 = vmatpush1.bf16.msra.mxu0 %v195
  %248 = vmatprep.subr.bf16.mxu0 0
  %249 = vmatpush1.bf16.msra.mxu0 %v196
  %250 = vmatprep.subr.bf16.mxu0 0
  %251 = vmatpush1.bf16.msra.mxu0 %v197
  %252 = vmatprep.subr.bf16.mxu0 0
  %253 = vmatpush1.bf16.msra.mxu0 %v198
  %254 = vmatprep.subr.bf16.mxu0 0
  %255 = vmatpush1.bf16.msra.mxu0 %v199
  %256 = vmatprep.subr.bf16.mxu0 0
  %257 = vmatpush1.bf16.msra.mxu0 %v200
  %258 = vmatprep.subr.bf16.mxu0 0
  %259 = vmatpush1.bf16.msra.mxu0 %v201
  %260 = vmatprep.subr.bf16.mxu0 0
  %261 = vmatpush1.bf16.msra.mxu0 %v202
  %262 = vmatprep.mubr.bf16.mxu0 %v106
  %263 = vmatmul.mubr.bf16.gmra.mrb[0].mxu0 %v105
  %v264 = vpop.f32.mrb[0].mxu0
  %v265 = vadd.f32 %v68, %v264
  %v266 = vpop.f32.mrb[0].mxu0
  %v267 = vpop.f32.mrb[0].mxu0
  %v268 = vadd.f32 %v73, %v267
  %v269 = vpop.f32.mrb[0].mxu0
  %270 = vmatprep.mubr.bf16.mxu0 %v109
  %271 = vmatmul.mubr.bf16.gmra.mrb[0].mxu0 %v108
  %v272 = vpop.f32.mrb[0].mxu0
  %v273 = vadd.f32 %v78, %v272
  %v274 = vpop.f32.mrb[0].mxu0
  %v275 = vpop.f32.mrb[0].mxu0
  %v276 = vadd.f32 %v83, %v275
  %v277 = vpop.f32.mrb[0].mxu0
  %278 = vdwg.mxu0
  %279 = vmatprep.subr.bf16.mxu0 0
  %280 = vmatpush1.bf16.msra.mxu0 %v203
  %281 = vmatprep.subr.bf16.mxu0 0
  %282 = vmatpush1.bf16.msra.mxu0 %v204
  %283 = vmatprep.subr.bf16.mxu0 0
  %284 = vmatpush1.bf16.msra.mxu0 0
  %285 = vmatprep.subr.bf16.mxu0 0
  %286 = vmatpush1.bf16.msra.mxu0 0
  %287 = vmatprep.subr.bf16.mxu0 0
  %288 = vmatpush1.bf16.msra.mxu0 0
  %289 = vmatprep.subr.bf16.mxu0 0
  %290 = vmatpush1.bf16.msra.mxu0 0
  %291 = vmatprep.subr.bf16.mxu0 0
  %292 = vmatpush1.bf16.msra.mxu0 0
  %293 = vmatprep.subr.bf16.mxu0 0
  %294 = vmatpush1.bf16.msra.mxu0 0
  %295 = vmatprep.subr.bf16.mxu0 0
  %296 = vmatpush1.bf16.msra.mxu0 0
  %297 = vmatprep.subr.bf16.mxu0 0
  %298 = vmatpush1.bf16.msra.mxu0 0
  %299 = vmatprep.subr.bf16.mxu0 0
  %300 = vmatpush1.bf16.msra.mxu0 0
  %301 = vmatprep.subr.bf16.mxu0 0
  %302 = vmatpush1.bf16.msra.mxu0 0
  %303 = vmatprep.subr.bf16.mxu0 0
  %304 = vmatpush1.bf16.msra.mxu0 0
  %305 = vmatprep.subr.bf16.mxu0 0
  %306 = vmatpush1.bf16.msra.mxu0 0
  %307 = vmatprep.subr.bf16.mxu0 0
  %308 = vmatpush1.bf16.msra.mxu0 0
  %309 = vmatprep.subr.bf16.mxu0 0
  %310 = vmatpush1.bf16.msra.mxu0 0
  %311 = vmatprep.mubr.bf16.mxu0 0
  %312 = vmatmul.mubr.bf16.gmra.mrb[0].mxu0 %v225
  %v313 = vpop.f32.mrb[0].mxu0
  %v314 = vadd.f32 %v265, %v313
  %v315 = vpop.f32.mrb[0].mxu0
  %v316 = vpop.f32.mrb[0].mxu0
  %v317 = vadd.f32 %v268, %v316
  %v318 = vpop.f32.mrb[0].mxu0
  %319 = vmatprep.mubr.bf16.mxu0 0
  %320 = vmatmul.mubr.bf16.gmra.mrb[0].mxu0 %v228
  %v321 = vpop.f32.mrb[0].mxu0
  %v322 = vadd.f32 %v273, %v321
  %v323 = vpop.f32.mrb[0].mxu0
  %v324 = vpop.f32.mrb[0].mxu0
  %v325 = vadd.f32 %v276, %v324
  %v326 = vpop.f32.mrb[0].mxu0
  %327 = vdwg.mxu0
  %v328 = vmax.f32 %v314, 0.0
  %v329 = vmax.f32 %v317, 0.0
  %v330 = vmax.f32 %v322, 0.0
  %v331 = vmax.f32 %v325, 0.0
  %s332 = smul.u32 0, 128
  %v333 = vlaneseq
  %v334 = vand.u32 %v333, 127
  %v335 = vstv %s332
  %v336 = vadd.s32 %v335, %v334
  %vm337 = vcmp.lt.s32.totalorder %v336, 32
  %v338 = vsel %vm337, %v328, 0.0
  %v339 = vsel %vm337, %v329, 0.0
  %v340 = vsel %vm337, %v330, 0.0
  %v341 = vsel %vm337, %v331, 0.0
  %342 = vst [vmem:[%s3] sm:$0xff] %v338
  %343 = vst [vmem:[%s3 + $0x8] sm:$0xff] %v339
  %344 = vst [vmem:[%s3 + $0x10] sm:$0xff] %v340
  %345 = vst [vmem:[%s3 + $0x18] sm:$0xff] %v341
  %346 = vadd.xlane.f32.xlu0 %v338
  %v347 = vpop.xlane.xlu0 %346
  %348 = vadd.xlane.f32.xlu0 %v339
  %v349 = vpop.xlane.xlu0 %348
  %350 = vadd.xlane.f32.xlu0 %v340
  %v351 = vpop.xlane.xlu0 %350
  %352 = vadd.xlane.f32.xlu0 %v341
  %v353 = vpop.xlane.xlu0 %352
  %v354 = vmul.f32 %v338, %v338
  %v355 = vmul.f32 %v339, %v339
  %v356 = vmul.f32 %v340, %v340
  %v357 = vmul.f32 %v341, %v341
  %358 = vadd.xlane.f32.xlu0 %v354
  %v359 = vpop.xlane.xlu0 %358
  %360 = vadd.xlane.f32.xlu0 %v355
  %v361 = vpop.xlane.xlu0 %360
  %362 = vadd.xlane.f32.xlu0 %v356
  %v363 = vpop.xlane.xlu0 %362
  %364 = vadd.xlane.f32.xlu0 %v357
  %v365 = vpop.xlane.xlu0 %364
  %vm366 = vcmask 7168
  %v367 = vsel %vm366, %v347, %v359
  %v368 = vsel %vm366, %v349, %v361
  %v369 = vsel %vm366, %v351, %v363
  %v370 = vsel %vm366, %v353, %v365
  %vm371 = vcmask 15360
  %372 = vst.msk [vmem:[%s4] sm:$0xff] %vm371, %v367
  %373 = vst.msk [vmem:[%s4 + $0x8] sm:$0xff] %vm371, %v368
  %374 = vst.msk [vmem:[%s4 + $0x10] sm:$0xff] %vm371, %v369
  %375 = vst.msk [vmem:[%s4 + $0x18] sm:$0xff] %vm371, %v370
  // Predicated region
  $region14: #{_lambda_.4} parent=0 // pred_check
    _
  $region15: #{_lambda_.4} parent=0 // pred_check_branch
    %377 = sbr.rel (0) target = $region17
  $region16: #{_lambda_.4} parent=0 // pred_region
    _
  $region17: #{_lambda_.4} parent=0 // pred_fallthru
    _
  // Predicated region
  $region18: #{_lambda_.4} parent=0 // pred_check
    _
  $region19: #{_lambda_.4} parent=0 // pred_check_branch
    %379 = sbr.rel (0) target = $region21
  $region20: #{_lambda_.4} parent=0 // pred_region
    _
  $region21: #{_lambda_.4} parent=0 // pred_fallthru
    _
  // Predicated region
  $region22: #{_lambda_.4} parent=0 // pred_check
    _
  $region23: #{_lambda_.4} parent=0 // pred_check_branch
    %381 = sbr.rel (0) target = $region25
  $region24: #{_lambda_.4} parent=0 // pred_region
    _
  $region25: #{_lambda_.4} parent=0 // pred_fallthru
    _
  // Predicated region
  $region26: #{_lambda_.4} parent=0 // pred_check
    _
  $region27: #{_lambda_.4} parent=0 // pred_check_branch
    %383 = sbr.rel (0) target = $region29
  $region28: #{_lambda_.4} parent=0 // pred_region
    _
  $region29: #{_lambda_.4} parent=0 // pred_fallthru
    _

</llo_original>
